<compile_context>
chip_gen: v7x
topology: tpu7x:2x2x1
jax: 0.10.0
libtpu: 0.0.40
codegen_flags: <defaults>
</compile_context>

<pallas_src>
import functools

import jax
import jax.numpy as jnp
from jax import lax
from jax.experimental import pallas as pl
from jax.experimental.pallas import tpu as pltpu

LANE = 128


def _round_up(x, m):
    return (x + m - 1) // m * m


def _vmem_capacity_bytes():
    """Physical VMEM per TensorCore; conservative 64 MiB (v7x) fallback."""
    try:
        info = pltpu.get_tpu_info()
        cap = int(getattr(info, "vmem_capacity_bytes", 0) or 0)
        if cap > 0:
            return cap
    except Exception:
        pass
    return 64 * 1024 * 1024


def feedforward_kernel(x_ref, w1_ref, w2_ref, w3_ref, o_ref, acc_ref):
    j = pl.program_id(1)

    @pl.when(j == 0)
    def _():
        acc_ref[...] = jnp.zeros_like(acc_ref)

    x = x_ref[...]                                        # (tm, emb), compute dtype
    # h = x @ W.T : contract emb (axis 1 of x) with emb (axis 1 of the weight
    # block). Transposed-RHS contraction is the standard attention Q@K^T
    # pattern on TPU; if a bundle dump ever shows per-step vxpose here, the
    # fallback is a one-time host-side weight transpose outside the kernel.
    dn = (((1,), (1,)), ((), ()))
    h1 = lax.dot_general(x, w1_ref[...], dn, preferred_element_type=jnp.float32)  # (tm, th)
    h2 = lax.dot_general(x, w2_ref[...], dn, preferred_element_type=jnp.float32)  # (tm, th)
    g = (h1 * jax.nn.sigmoid(h1)) * h2                    # SwiGLU gate in f32 (EUP + VPU)
    # Partial fc3: g_j @ W3[:, j].T accumulated in f32.
    acc_ref[...] += lax.dot_general(g.astype(x.dtype), w3_ref[...], dn,
                                    preferred_element_type=jnp.float32)           # (tm, emb)

    @pl.when(j == pl.num_programs(1) - 1)
    def _():
        o_ref[...] = acc_ref[...].astype(o_ref.dtype)


@functools.partial(jax.jit, static_argnames=("compute_dtype", "tm", "th"))
def feedforward(x, w1, w2, w3, *, compute_dtype=None, tm=None, th=None):
    """SwiGLU FFN: fc3( silu(fc1(x)) * fc2(x) ), bias-free.

    x: [batch, seq, emb]; w1, w2: [hidden, emb]; w3: [emb, hidden] (PyTorch layout).
    compute_dtype: optional matmul operand dtype (e.g. jnp.bfloat16) — halves the
      dominant weight HBM stream / doubles MXU throughput for f32 models; the
      accumulation stays f32 and the output keeps x.dtype.
    """
    batch, seq, emb = x.shape
    hidden, emb_w = w1.shape
    assert emb_w == emb and w2.shape == (hidden, emb) and w3.shape == (emb, hidden)
    M = batch * seq

    op_dtype = jnp.dtype(compute_dtype) if compute_dtype is not None else jnp.dtype(x.dtype)
    out_dtype = x.dtype
    op_bytes = op_dtype.itemsize
    out_bytes = jnp.dtype(out_dtype).itemsize

    # ---- pad hidden to a lane multiple so the reduction axis tiles cleanly.
    # Zero rows in W1/W2 and zero cols in W3 are exact: silu(0)*0 == 0.
    hidden_pad = max(_round_up(hidden, LANE), LANE)
    if hidden_pad != hidden:
        w1 = jnp.pad(w1, ((0, hidden_pad - hidden), (0, 0)))
        w2 = jnp.pad(w2, ((0, hidden_pad - hidden), (0, 0)))
        w3 = jnp.pad(w3, ((0, 0), (0, hidden_pad - hidden)))

    x2d = x.reshape(M, emb)
    if op_dtype != x2d.dtype:
        x2d = x2d.astype(op_dtype)
    w1 = w1.astype(op_dtype)
    w2 = w2.astype(op_dtype)
    w3 = w3.astype(op_dtype)

    # ---- per-generation VMEM budget and tile selection ----------------------
    vmem_cap = _vmem_capacity_bytes()            # 128 MiB v5e/v6e, 64 MiB v7x
    vmem_limit = max(32 << 20, min(int(vmem_cap * 0.75), vmem_cap - (16 << 20)))
    budget = int(vmem_limit * 0.85)              # headroom for compiler scratch

    m_full = _round_up(M, 8)
    tm_cands = [t for t in (1024, 512, 384, 256, 128, 64, 32, 16, 8) if t <= m_full]
    if m_full <= 1024 and m_full not in tm_cands:
        tm_cands.insert(0, m_full)
    th_cands = [t for t in (1024, 512, 256, 128) if hidden_pad % t == 0]
    if hidden_pad <= 1024 and hidden_pad not in th_cands:
        th_cands.append(hidden_pad)
    th_cands = sorted(set(th_cands), reverse=True)
    if tm is not None:
        tm_cands = [tm]
    if th is not None:
        th_cands = [th]

    def vmem_use(tm_, th_):
        return (2 * tm_ * emb * (op_bytes + out_bytes)   # x + out blocks (double-buffered)
                + 6 * th_ * emb * op_bytes               # W1/W2/W3 blocks (double-buffered)
                + tm_ * emb * 4)                         # f32 accumulator scratch

    tm_sel, th_sel = tm_cands[-1], th_cands[-1]
    found = False
    for tm_ in tm_cands:            # tm first: it sets flops-per-weight-byte (roofline)
        for th_ in th_cands:
            if vmem_use(tm_, th_) <= budget:
                tm_sel, th_sel = tm_, th_
                found = True
                break
        if found:
            break
    tm, th = tm_sel, th_sel
    if hidden_pad % th != 0:
        raise ValueError(f"th={th} must divide the padded hidden dim {hidden_pad}")

    grid_m = pl.cdiv(M, tm)          # ragged last row tile: OOB reads stay in dropped rows
    grid = (grid_m, hidden_pad // th)

    cost = pl.CostEstimate(
        flops=6 * M * emb * hidden,
        transcendentals=2 * M * hidden,                             # sigmoid ~ exp + recip
        bytes_accessed=(M * emb * op_bytes                          # x read once
                        + 3 * hidden_pad * emb * op_bytes * grid_m  # weights per row tile
                        + M * emb * out_bytes),                     # output
    )

    out2d = pl.pallas_call(
        feedforward_kernel,
        out_shape=jax.ShapeDtypeStruct((M, emb), out_dtype),
        grid_spec=pltpu.PrefetchScalarGridSpec(
            num_scalar_prefetch=0,
            grid=grid,
            in_specs=[
                pl.BlockSpec((tm, emb), lambda i, j: (i, 0)),   # x row tile (resident over j)
                pl.BlockSpec((th, emb), lambda i, j: (j, 0)),   # W1 hidden block
                pl.BlockSpec((th, emb), lambda i, j: (j, 0)),   # W2 hidden block
                pl.BlockSpec((emb, th), lambda i, j: (0, j)),   # W3 hidden block
            ],
            out_specs=pl.BlockSpec((tm, emb), lambda i, j: (i, 0)),
            scratch_shapes=[pltpu.VMEM((tm, emb), jnp.float32)],
        ),
        compiler_params=pltpu.CompilerParams(
            dimension_semantics=("parallel", "arbitrary"),
            vmem_limit_bytes=vmem_limit,
        ),
        cost_estimate=cost,
    )(x2d, w1, w2, w3)

    return out2d.reshape(batch, seq, emb)


def feedforward_ref(x, w1, w2, w3):
    h1 = x @ w1.T
    h2 = x @ w2.T
    g = (h1 * jax.nn.sigmoid(h1)) * h2
    return g @ w3.T


if __name__ == "__main__":
    # cfg: emb_dim=32, hidden_dim=64, dtype=float32
    batch, seq, emb_dim, hidden_dim = 2, 8, 32, 64
    dtype = jnp.float32

    key = jax.random.PRNGKey(0)
    kx, k1, k2, k3 = jax.random.split(key, 4)

    x = jax.random.normal(kx, (batch, seq, emb_dim), dtype=dtype)
    # PyTorch nn.Linear weight shapes: fc1/fc2 [hidden, emb], fc3 [emb, hidden]
    w1 = jax.random.normal(k1, (hidden_dim, emb_dim), dtype=dtype) * 0.05
    w2 = jax.random.normal(k2, (hidden_dim, emb_dim), dtype=dtype) * 0.05
    w3 = jax.random.normal(k3, (emb_dim, hidden_dim), dtype=dtype) * 0.05

    out = feedforward(x, w1, w2, w3)
    jax.block_until_ready(out)

    ref = feedforward_ref(x, w1, w2, w3)
    assert out.shape == (batch, seq, emb_dim)
    assert jnp.allclose(out, ref, atol=1e-5, rtol=1e-5)

    # Optional bf16-operand fast path (f32 accumulation, output stays f32).
    out_bf16 = feedforward(x, w1, w2, w3, compute_dtype=jnp.bfloat16)
    jax.block_until_ready(out_bf16)
    assert out_bf16.dtype == x.dtype
    assert jnp.allclose(out_bf16, ref, atol=5e-2, rtol=5e-2)

    print("KERNEL_OK")
</pallas_src>

<mosaic_0001>
module attributes {stable_mosaic.version = 11 : i64} {
  func.func @feedforward_kernel(%arg0: i32, %arg1: i32, %arg2: memref<16x32xf32, #tpu.memory_space<vmem>>, %arg3: memref<128x32xf32, #tpu.memory_space<vmem>>, %arg4: memref<128x32xf32, #tpu.memory_space<vmem>>, %arg5: memref<32x128xf32, #tpu.memory_space<vmem>>, %arg6: memref<16x32xf32, #tpu.memory_space<vmem>>, %arg7: memref<16x32xf32, #tpu.memory_space<vmem>>) attributes {dimension_semantics = [#tpu.dimension_semantics<parallel>, #tpu.dimension_semantics<arbitrary>], iteration_bounds = array<i64: 1, 1>, scalar_prefetch = 0 : i64, scratch_operands = 1 : i64, tpu.core_type = #tpu.core_type<tc>, window_params = [{transform_indices = @transform_0, window_bounds = array<i64: 16, 32>}, {transform_indices = @transform_1, window_bounds = array<i64: 128, 32>}, {transform_indices = @transform_2, window_bounds = array<i64: 128, 32>}, {transform_indices = @transform_3, window_bounds = array<i64: 32, 128>}, {transform_indices = @transform_4, window_bounds = array<i64: 16, 32>}]} {
    %c0_i32 = arith.constant 0 : i32
    %0 = arith.cmpi eq, %arg1, %c0_i32 : i32
    %1 = arith.extui %0 : i1 to i32
    %c0_i32_0 = arith.constant 0 : i32
    %2 = arith.cmpi ne, %1, %c0_i32_0 : i32
    scf.if %2 {
      %cst_17 = arith.constant 0.000000e+00 : f32
      %23 = vector.broadcast %cst_17 : f32 to vector<16x32xf32>
      %c0_18 = arith.constant 0 : index
      %c0_19 = arith.constant 0 : index
      %24 = vector.load %arg7[%c0_18, %c0_19] : memref<16x32xf32, #tpu.memory_space<vmem>>, vector<16x32xf32>
      tpu.vector_store %arg7[%c0_18, %c0_19], %23 {strides = array<i32>} : memref<16x32xf32, #tpu.memory_space<vmem>>, vector<16x32xf32>,
    } else {
    }
    %c0 = arith.constant 0 : index
    %c0_1 = arith.constant 0 : index
    %3 = vector.load %arg2[%c0, %c0_1] : memref<16x32xf32, #tpu.memory_space<vmem>>, vector<16x32xf32>
    %c0_2 = arith.constant 0 : index
    %c0_3 = arith.constant 0 : index
    %4 = vector.load %arg3[%c0_2, %c0_3] : memref<128x32xf32, #tpu.memory_space<vmem>>, vector<128x32xf32>
    %cst = arith.constant dense<0.000000e+00> : vector<16x128xf32>
    %5 = tpu.matmul %3, %4, %cst {dimension_numbers = #tpu.dot_dimension_numbers<[1], [1], [0], [0], [0, 0, 1, 0], [], []>} : vector<16x32xf32>, vector<128x32xf32>, vector<16x128xf32> -> vector<16x128xf32>
    %c0_4 = arith.constant 0 : index
    %c0_5 = arith.constant 0 : index
    %6 = vector.load %arg4[%c0_4, %c0_5] : memref<128x32xf32, #tpu.memory_space<vmem>>, vector<128x32xf32>
    %cst_6 = arith.constant dense<0.000000e+00> : vector<16x128xf32>
    %7 = tpu.matmul %3, %6, %cst_6 {dimension_numbers = #tpu.dot_dimension_numbers<[1], [1], [0], [0], [0, 0, 1, 0], [], []>} : vector<16x32xf32>, vector<128x32xf32>, vector<16x128xf32> -> vector<16x128xf32>
    %8 = arith.negf %5 : vector<16x128xf32>
    %9 = math.exp %8 : vector<16x128xf32>
    %cst_7 = arith.constant 1.000000e+00 : f32
    %10 = vector.broadcast %cst_7 : f32 to vector<16x128xf32>
    %11 = arith.addf %10, %9 : vector<16x128xf32>
    %12 = arith.divf %10, %11 : vector<16x128xf32>
    %13 = arith.mulf %5, %12 : vector<16x128xf32>
    %14 = arith.mulf %13, %7 : vector<16x128xf32>
    %c0_8 = arith.constant 0 : index
    %c0_9 = arith.constant 0 : index
    %15 = vector.load %arg7[%c0_8, %c0_9] : memref<16x32xf32, #tpu.memory_space<vmem>>, vector<16x32xf32>
    %c0_10 = arith.constant 0 : index
    %c0_11 = arith.constant 0 : index
    %16 = vector.load %arg5[%c0_10, %c0_11] : memref<32x128xf32, #tpu.memory_space<vmem>>, vector<32x128xf32>
    %cst_12 = arith.constant dense<0.000000e+00> : vector<16x32xf32>
    %17 = tpu.matmul %14, %16, %cst_12 {dimension_numbers = #tpu.dot_dimension_numbers<[1], [1], [0], [0], [0, 0, 1, 0], [], []>} : vector<16x128xf32>, vector<32x128xf32>, vector<16x32xf32> -> vector<16x32xf32>
    %18 = arith.addf %15, %17 : vector<16x32xf32>
    %c0_13 = arith.constant 0 : index
    %c0_14 = arith.constant 0 : index
    %19 = vector.load %arg7[%c0_13, %c0_14] : memref<16x32xf32, #tpu.memory_space<vmem>>, vector<16x32xf32>
    tpu.vector_store %arg7[%c0_13, %c0_14], %18 {strides = array<i32>} : memref<16x32xf32, #tpu.memory_space<vmem>>, vector<16x32xf32>,
    %c0_i32_15 = arith.constant 0 : i32
    %20 = arith.cmpi eq, %arg1, %c0_i32_15 : i32
    %21 = arith.extui %20 : i1 to i32
    %c0_i32_16 = arith.constant 0 : i32
    %22 = arith.cmpi ne, %21, %c0_i32_16 : i32
    scf.if %22 {
      %c0_17 = arith.constant 0 : index
      %c0_18 = arith.constant 0 : index
      %23 = vector.load %arg7[%c0_17, %c0_18] : memref<16x32xf32, #tpu.memory_space<vmem>>, vector<16x32xf32>
      %c0_19 = arith.constant 0 : index
      %c0_20 = arith.constant 0 : index
      %24 = vector.load %arg6[%c0_19, %c0_20] : memref<16x32xf32, #tpu.memory_space<vmem>>, vector<16x32xf32>
      tpu.vector_store %arg6[%c0_19, %c0_20], %23 {strides = array<i32>} : memref<16x32xf32, #tpu.memory_space<vmem>>, vector<16x32xf32>,
    } else {
    }
    return
  }
  func.func @transform_0(%arg0: i32, %arg1: i32) -> (i32, i32) {
    %c0_i32 = arith.constant 0 : i32
    %c0_i32_0 = arith.constant 0 : i32
    return %arg0, %c0_i32 : i32, i32
  }
  func.func @transform_1(%arg0: i32, %arg1: i32) -> (i32, i32) {
    %c0_i32 = arith.constant 0 : i32
    %c0_i32_0 = arith.constant 0 : i32
    return %arg1, %c0_i32 : i32, i32
  }
  func.func @transform_2(%arg0: i32, %arg1: i32) -> (i32, i32) {
    %c0_i32 = arith.constant 0 : i32
    %c0_i32_0 = arith.constant 0 : i32
    return %arg1, %c0_i32 : i32, i32
  }
  func.func @transform_3(%arg0: i32, %arg1: i32) -> (i32, i32) {
    %c0_i32 = arith.constant 0 : i32
    %c0_i32_0 = arith.constant 0 : i32
    return %c0_i32, %arg1 : i32, i32
  }
  func.func @transform_4(%arg0: i32, %arg1: i32) -> (i32, i32) {
    %c0_i32 = arith.constant 0 : i32
    %c0_i32_0 = arith.constant 0 : i32
    return %arg0, %c0_i32 : i32, i32
  }
}

</mosaic_0001>

<llo_original>
// kernel: feedforward.1
$region0: #{feedforward.1}
  #allocation0 [shape = 'u32[]', space=smem, size = 0x4, offset = 0x4, fixed_abs, tag = 'smem constant byte address 0x4 - core index']
  #allocation1 [shape = 'u32[144,128]{1,0:T(1,128)}', space=vmem, size = 0x12000, scoped, tag = 'internal scratch']
  #allocation2 [shape = 'f32[16,32]{1,0:T(8,128)}', space=vmem, size = 0x2000, scoped, tag = 'scratch operand']
  %s0 = inlined_call_operand.vmem [shape: f32[16,32], index: 0, kind: input, shape index: {}]
  %s1 = inlined_call_operand.vmem [shape: f32[128,32], index: 1, kind: input, shape index: {}]
  %s2 = inlined_call_operand.vmem [shape: f32[128,32], index: 2, kind: input, shape index: {}]
  %s3 = inlined_call_operand.vmem [shape: f32[32,128], index: 3, kind: input, shape index: {}]
  %s4 = inlined_call_operand.hbm [shape: f32[16,32], index: 4, kind: output, shape index: {}]
  %s5 = sld [smem:[#allocation0]]
  $region34: #{feedforward.1} parent=0
    _
  %s7 = ssub.s32 1, %s5
  %s8 = scalar_select 0, %s7, %s5
  $region1: #{feedforward.1} parent=0
    #allocation3 [shape = 'u8[8192]{0}', space=vmem, size = 0x2000, scoped, tag = 'output window, operand 0, single buffered']
    #allocation4 [shape = 's32[1]{0}', space=sflag, size = 0x4, scoped, tag = 'scoped memory for feedforward.1']
    %9 = vsyncpa [#allocation4], 0
    // Predicated region
    $region2: #{feedforward.1} parent=1 // pred_check
      _
    $region3: #{feedforward.1} parent=1 // pred_check_branch
      %11 = sbr.rel (0) target = $region5
    $region4: #{feedforward.1} parent=1 // pred_region
      _
    $region5: #{feedforward.1} parent=1 // pred_fallthru
      _
    // Predicated region
    $region6: #{feedforward.1} parent=1 // pred_check
      _
    $region7: #{feedforward.1} parent=1 // pred_check_branch
      %13 = sbr.rel (0) target = $region9
    $region8: #{feedforward.1} parent=1 // pred_region
      _
    $region9: #{feedforward.1} parent=1 // pred_fallthru
      _
    // Predicated region
    $region10: #{feedforward.1} parent=1 // pred_check
      _
    $region11: #{feedforward.1} parent=1 // pred_check_branch
      %15 = sbr.rel (0) target = $region13
    $region12: #{feedforward.1} parent=1 // pred_region
      _
    $region13: #{feedforward.1} parent=1 // pred_fallthru
      _
    // Predicated region
    $region14: #{feedforward.1} parent=1 // pred_check
      _
    $region15: #{feedforward.1} parent=1 // pred_check_branch
      %17 = sbr.rel (0) target = $region17
    $region16: #{feedforward.1} parent=1 // pred_region
      _
    $region17: #{feedforward.1} parent=1 // pred_fallthru
      _
    %p18 = scmp.eq.s32.totalorder 0, 0
    // Predicated region
    $region18: #{feedforward.1} parent=1 // pred_check
      %p19 = pneg %p18
    $region19: #{feedforward.1} parent=1 // pred_check_branch
      %21 = sbr.rel (%p19) target = $region21
    $region20: #{feedforward.1} parent=1 // pred_region
      %vm22 = vcmask 261120
      %23 = vst.msk [vmem:[#allocation2] sm:$0xff] %vm22, 0.0
      %24 = vst.msk [vmem:[#allocation2 + $0x8] sm:$0xff] %vm22, 0.0
    $region21: #{feedforward.1} parent=1 // pred_fallthru
      _
    %v25 = vld [vmem:[%s0] sm:$0xff]
    %v26 = vld [vmem:[%s0 + $0x8] sm:$0xff]
    %v27 = vld [vmem:[%s1] sm:$0xff]
    %v28 = vld [vmem:[%s1 + $0x8] sm:$0xff]
    %v29 = vld [vmem:[%s1 + $0x10] sm:$0xff]
    %v30 = vld [vmem:[%s1 + $0x18] sm:$0xff]
    %v31 = vld [vmem:[%s1 + $0x20] sm:$0xff]
    %v32 = vld [vmem:[%s1 + $0x28] sm:$0xff]
    %v33 = vld [vmem:[%s1 + $0x30] sm:$0xff]
    %v34 = vld [vmem:[%s1 + $0x38] sm:$0xff]
    %v35 = vld [vmem:[%s1 + $0x40] sm:$0xff]
    %v36 = vld [vmem:[%s1 + $0x48] sm:$0xff]
    %v37 = vld [vmem:[%s1 + $0x50] sm:$0xff]
    %v38 = vld [vmem:[%s1 + $0x58] sm:$0xff]
    %v39 = vld [vmem:[%s1 + $0x60] sm:$0xff]
    %v40 = vld [vmem:[%s1 + $0x68] sm:$0xff]
    %v41 = vld [vmem:[%s1 + $0x70] sm:$0xff]
    %v42 = vld [vmem:[%s1 + $0x78] sm:$0xff]
    %vm43 = vcmask 261120
    %v45 = vsel %vm43, %v25, 0
    %v48 = vsel %vm43, %v26, 0
    %v51 = vsel %vm43, %v27, 0
    %v54 = vsel %vm43, %v28, 0
    %v57 = vsel %vm43, %v29, 0
    %v60 = vsel %vm43, %v30, 0
    %v63 = vsel %vm43, %v31, 0
    %v66 = vsel %vm43, %v32, 0
    %v69 = vsel %vm43, %v33, 0
    %v72 = vsel %vm43, %v34, 0
    %v75 = vsel %vm43, %v35, 0
    %v78 = vsel %vm43, %v36, 0
    %v81 = vsel %vm43, %v37, 0
    %v84 = vsel %vm43, %v38, 0
    %v87 = vsel %vm43, %v39, 0
    %v90 = vsel %vm43, %v40, 0
    %v93 = vsel %vm43, %v41, 0
    %v96 = vsel %vm43, %v42, 0
    %98 = vmatprep.subr.mxu0 0.0
    %99 = vmatpush1.xpose.msra.mxu0 %v51
    %100 = vmatprep.subr.mxu0 0.0
    %101 = vmatpush1.xpose.msra.mxu0 %v54
    %102 = vmatprep.subr.mxu0 0.0
    %103 = vmatpush1.xpose.msra.mxu0 %v57
    %104 = vmatprep.subr.mxu0 0.0
    %105 = vmatpush1.xpose.msra.mxu0 %v60
    %106 = vmatprep.subr.mxu0 0.0
    %107 = vmatpush1.xpose.msra.mxu0 %v63
    %108 = vmatprep.subr.mxu0 0.0
    %109 = vmatpush1.xpose.msra.mxu0 %v66
    %110 = vmatprep.subr.mxu0 0.0
    %111 = vmatpush1.xpose.msra.mxu0 %v69
    %112 = vmatprep.subr.mxu0 0.0
    %113 = vmatpush1.xpose.msra.mxu0 %v72
    %114 = vmatprep.subr.mxu0 0.0
    %115 = vmatpush1.xpose.msra.mxu0 %v75
    %116 = vmatprep.subr.mxu0 0.0
    %117 = vmatpush1.xpose.msra.mxu0 %v78
    %118 = vmatprep.subr.mxu0 0.0
    %119 = vmatpush1.xpose.msra.mxu0 %v81
    %120 = vmatprep.subr.mxu0 0.0
    %121 = vmatpush1.xpose.msra.mxu0 %v84
    %122 = vmatprep.subr.mxu0 0.0
    %123 = vmatpush1.xpose.msra.mxu0 %v87
    %124 = vmatprep.subr.mxu0 0.0
    %125 = vmatpush1.xpose.msra.mxu0 %v90
    %126 = vmatprep.subr.mxu0 0.0
    %127 = vmatpush1.xpose.msra.mxu0 %v93
    %128 = vmatprep.subr.mxu0 0.0
    %129 = vmatpush1.xpose.msra.mxu0 %v96
    %130 = vmatprep.subr.mxu0 0.0
    %131 = vmatpush1.xpose.msra.mxu0 0.0
    %132 = vmatprep.subr.mxu0 0.0
    %133 = vmatpush1.xpose.msra.mxu0 0.0
    %134 = vmatprep.subr.mxu0 0.0
    %135 = vmatpush1.xpose.msra.mxu0 0.0
    %136 = vmatprep.subr.mxu0 0.0
    %137 = vmatpush1.xpose.msra.mxu0 0.0
    %138 = vmatprep.subr.mxu0 0.0
    %139 = vmatpush1.xpose.msra.mxu0 0.0
    %140 = vmatprep.subr.mxu0 0.0
    %141 = vmatpush1.xpose.msra.mxu0 0.0
    %142 = vmatprep.subr.mxu0 0.0
    %143 = vmatpush1.xpose.msra.mxu0 0.0
    %144 = vmatprep.subr.mxu0 0.0
    %145 = vmatpush1.xpose.msra.mxu0 0.0
    %146 = vmatprep.subr.mxu0 0.0
    %147 = vmatpush1.xpose.msra.mxu0 0.0
    %148 = vmatprep.subr.mxu0 0.0
    %149 = vmatpush1.xpose.msra.mxu0 0.0
    %150 = vmatprep.subr.mxu0 0.0
    %151 = vmatpush1.xpose.msra.mxu0 0.0
    %152 = vmatprep.subr.mxu0 0.0
    %153 = vmatpush1.xpose.msra.mxu0 0.0
    %154 = vmatprep.subr.mxu0 0.0
    %155 = vmatpush1.xpose.msra.mxu0 0.0
    %156 = vmatprep.subr.mxu0 0.0
    %157 = vmatpush1.xpose.msra.mxu0 0.0
    %158 = vmatprep.subr.mxu0 0.0
    %159 = vmatpush1.xpose.msra.mxu0 0.0
    %160 = vmatprep.subr.mxu0 0.0
    %161 = vmatpush1.xpose.msra.mxu0 0.0
    %162 = vmatprep.mubr.f32.mxu0 0.0
    %163 = vmatmul.mubr.f32.gmra.mrb[0].mxu0 %v45
    %v164 = vpop.f32.mrb[0].mxu0
    %v165 = vadd.f32 0.0, %v164
    %v166 = vpop.f32.mrb[0].mxu0
    %167 = vmatprep.mubr.f32.mxu0 0.0
    %168 = vmatmul.mubr.f32.gmra.mrb[0].mxu0 %v48
    %v169 = vpop.f32.mrb[0].mxu0
    %v170 = vadd.f32 0.0, %v169
    %v171 = vpop.f32.mrb[0].mxu0
    %172 = vdwg.mxu0
    %v173 = vld [vmem:[%s2] sm:$0xff]
    %v174 = vld [vmem:[%s2 + $0x8] sm:$0xff]
    %v175 = vld [vmem:[%s2 + $0x10] sm:$0xff]
    %v176 = vld [vmem:[%s2 + $0x18] sm:$0xff]
    %v177 = vld [vmem:[%s2 + $0x20] sm:$0xff]
    %v178 = vld [vmem:[%s2 + $0x28] sm:$0xff]
    %v179 = vld [vmem:[%s2 + $0x30] sm:$0xff]
    %v180 = vld [vmem:[%s2 + $0x38] sm:$0xff]
    %v181 = vld [vmem:[%s2 + $0x40] sm:$0xff]
    %v182 = vld [vmem:[%s2 + $0x48] sm:$0xff]
    %v183 = vld [vmem:[%s2 + $0x50] sm:$0xff]
    %v184 = vld [vmem:[%s2 + $0x58] sm:$0xff]
    %v185 = vld [vmem:[%s2 + $0x60] sm:$0xff]
    %v186 = vld [vmem:[%s2 + $0x68] sm:$0xff]
    %v187 = vld [vmem:[%s2 + $0x70] sm:$0xff]
    %v188 = vld [vmem:[%s2 + $0x78] sm:$0xff]
    %v190 = vsel %vm43, %v173, 0
    %v193 = vsel %vm43, %v174, 0
    %v196 = vsel %vm43, %v175, 0
    %v199 = vsel %vm43, %v176, 0
    %v202 = vsel %vm43, %v177, 0
    %v205 = vsel %vm43, %v178, 0
    %v208 = vsel %vm43, %v179, 0
    %v211 = vsel %vm43, %v180, 0
    %v214 = vsel %vm43, %v181, 0
    %v217 = vsel %vm43, %v182, 0
    %v220 = vsel %vm43, %v183, 0
    %v223 = vsel %vm43, %v184, 0
    %v226 = vsel %vm43, %v185, 0
    %v229 = vsel %vm43, %v186, 0
    %v232 = vsel %vm43, %v187, 0
    %v235 = vsel %vm43, %v188, 0
    %237 = vmatprep.subr.mxu0 0.0
    %238 = vmatpush1.xpose.msra.mxu0 %v190
    %239 = vmatprep.subr.mxu0 0.0
    %240 = vmatpush1.xpose.msra.mxu0 %v193
    %241 = vmatprep.subr.mxu0 0.0
    %242 = vmatpush1.xpose.msra.mxu0 %v196
    %243 = vmatprep.subr.mxu0 0.0
    %244 = vmatpush1.xpose.msra.mxu0 %v199
    %245 = vmatprep.subr.mxu0 0.0
    %246 = vmatpush1.xpose.msra.mxu0 %v202
    %247 = vmatprep.subr.mxu0 0.0
    %248 = vmatpush1.xpose.msra.mxu0 %v205
    %249 = vmatprep.subr.mxu0 0.0
    %250 = vmatpush1.xpose.msra.mxu0 %v208
    %251 = vmatprep.subr.mxu0 0.0
    %252 = vmatpush1.xpose.msra.mxu0 %v211
    %253 = vmatprep.subr.mxu0 0.0
    %254 = vmatpush1.xpose.msra.mxu0 %v214
    %255 = vmatprep.subr.mxu0 0.0
    %256 = vmatpush1.xpose.msra.mxu0 %v217
    %257 = vmatprep.subr.mxu0 0.0
    %258 = vmatpush1.xpose.msra.mxu0 %v220
    %259 = vmatprep.subr.mxu0 0.0
    %260 = vmatpush1.xpose.msra.mxu0 %v223
    %261 = vmatprep.subr.mxu0 0.0
    %262 = vmatpush1.xpose.msra.mxu0 %v226
    %263 = vmatprep.subr.mxu0 0.0
    %264 = vmatpush1.xpose.msra.mxu0 %v229
    %265 = vmatprep.subr.mxu0 0.0
    %266 = vmatpush1.xpose.msra.mxu0 %v232
    %267 = vmatprep.subr.mxu0 0.0
    %268 = vmatpush1.xpose.msra.mxu0 %v235
    %269 = vmatprep.subr.mxu0 0.0
    %270 = vmatpush1.xpose.msra.mxu0 0.0
    %271 = vmatprep.subr.mxu0 0.0
    %272 = vmatpush1.xpose.msra.mxu0 0.0
    %273 = vmatprep.subr.mxu0 0.0
    %274 = vmatpush1.xpose.msra.mxu0 0.0
    %275 = vmatprep.subr.mxu0 0.0
    %276 = vmatpush1.xpose.msra.mxu0 0.0
    %277 = vmatprep.subr.mxu0 0.0
    %278 = vmatpush1.xpose.msra.mxu0 0.0
    %279 = vmatprep.subr.mxu0 0.0
    %280 = vmatpush1.xpose.msra.mxu0 0.0
    %281 = vmatprep.subr.mxu0 0.0
    %282 = vmatpush1.xpose.msra.mxu0 0.0
    %283 = vmatprep.subr.mxu0 0.0
    %284 = vmatpush1.xpose.msra.mxu0 0.0
    %285 = vmatprep.subr.mxu0 0.0
    %286 = vmatpush1.xpose.msra.mxu0 0.0
    %287 = vmatprep.subr.mxu0 0.0
    %288 = vmatpush1.xpose.msra.mxu0 0.0
    %289 = vmatprep.subr.mxu0 0.0
    %290 = vmatpush1.xpose.msra.mxu0 0.0
    %291 = vmatprep.subr.mxu0 0.0
    %292 = vmatpush1.xpose.msra.mxu0 0.0
    %293 = vmatprep.subr.mxu0 0.0
    %294 = vmatpush1.xpose.msra.mxu0 0.0
    %295 = vmatprep.subr.mxu0 0.0
    %296 = vmatpush1.xpose.msra.mxu0 0.0
    %297 = vmatprep.subr.mxu0 0.0
    %298 = vmatpush1.xpose.msra.mxu0 0.0
    %299 = vmatprep.subr.mxu0 0.0
    %300 = vmatpush1.xpose.msra.mxu0 0.0
    %301 = vmatprep.mubr.f32.mxu0 0.0
    %302 = vmatmul.mubr.f32.gmra.mrb[0].mxu0 %v45
    %v303 = vpop.f32.mrb[0].mxu0
    %v304 = vadd.f32 0.0, %v303
    %v305 = vpop.f32.mrb[0].mxu0
    %306 = vmatprep.mubr.f32.mxu0 0.0
    %307 = vmatmul.mubr.f32.gmra.mrb[0].mxu0 %v48
    %v308 = vpop.f32.mrb[0].mxu0
    %v309 = vadd.f32 0.0, %v308
    %v310 = vpop.f32.mrb[0].mxu0
    %311 = vdwg.mxu0
    %v312 = vxor.u32 %v165, 2147483648
    %v313 = vxor.u32 %v170, 2147483648
    %v314 = vmul.f32 %v312, 1.442695
    %v315 = vpow.pop %v314
    %v316 = vmul.f32 %v313, 1.442695
    %v317 = vpow.pop %v316
    %v318 = vadd.f32 %v315, 1.0
    %v319 = vadd.f32 %v317, 1.0
    %v320 = vrcp.pop %v318
    %v321 = vmul.f32 1.0, %v320
    %v322 = vrcp.pop %v319
    %v323 = vmul.f32 1.0, %v322
    %v324 = vmul.f32 %v165, %v321
    %v325 = vmul.f32 %v170, %v323
    %v326 = vmul.f32 %v324, %v304
    %v327 = vmul.f32 %v325, %v309
    %v328 = vld [vmem:[#allocation2] sm:$0xff]
    %v329 = vld [vmem:[#allocation2 + $0x8] sm:$0xff]
    %v330 = vld [vmem:[%s3] sm:$0xff]
    %v331 = vld [vmem:[%s3 + $0x8] sm:$0xff]
    %v332 = vld [vmem:[%s3 + $0x10] sm:$0xff]
    %v333 = vld [vmem:[%s3 + $0x18] sm:$0xff]
    %334 = vmatprep.subr.mxu0 0.0
    %335 = vmatpush1.xpose.msra.mxu0 %v330
    %336 = vmatprep.subr.mxu0 0.0
    %337 = vmatpush1.xpose.msra.mxu0 %v331
    %338 = vmatprep.subr.mxu0 0.0
    %339 = vmatpush1.xpose.msra.mxu0 %v332
    %340 = vmatprep.subr.mxu0 0.0
    %341 = vmatpush1.xpose.msra.mxu0 %v333
    %342 = vmatprep.subr.mxu0 0.0
    %343 = vmatpush1.xpose.msra.mxu0 0.0
    %344 = vmatprep.subr.mxu0 0.0
    %345 = vmatpush1.xpose.msra.mxu0 0.0
    %346 = vmatprep.subr.mxu0 0.0
    %347 = vmatpush1.xpose.msra.mxu0 0.0
    %348 = vmatprep.subr.mxu0 0.0
    %349 = vmatpush1.xpose.msra.mxu0 0.0
    %350 = vmatprep.subr.mxu0 0.0
    %351 = vmatpush1.xpose.msra.mxu0 0.0
    %352 = vmatprep.subr.mxu0 0.0
    %353 = vmatpush1.xpose.msra.mxu0 0.0
    %354 = vmatprep.subr.mxu0 0.0
    %355 = vmatpush1.xpose.msra.mxu0 0.0
    %356 = vmatprep.subr.mxu0 0.0
    %357 = vmatpush1.xpose.msra.mxu0 0.0
    %358 = vmatprep.subr.mxu0 0.0
    %359 = vmatpush1.xpose.msra.mxu0 0.0
    %360 = vmatprep.subr.mxu0 0.0
    %361 = vmatpush1.xpose.msra.mxu0 0.0
    %362 = vmatprep.subr.mxu0 0.0
    %363 = vmatpush1.xpose.msra.mxu0 0.0
    %364 = vmatprep.subr.mxu0 0.0
    %365 = vmatpush1.xpose.msra.mxu0 0.0
    %366 = vmatprep.subr.mxu0 0.0
    %367 = vmatpush1.xpose.msra.mxu0 0.0
    %368 = vmatprep.subr.mxu0 0.0
    %369 = vmatpush1.xpose.msra.mxu0 0.0
    %370 = vmatprep.subr.mxu0 0.0
    %371 = vmatpush1.xpose.msra.mxu0 0.0
    %372 = vmatprep.subr.mxu0 0.0
    %373 = vmatpush1.xpose.msra.mxu0 0.0
    %374 = vmatprep.subr.mxu0 0.0
    %375 = vmatpush1.xpose.msra.mxu0 0.0
    %376 = vmatprep.subr.mxu0 0.0
    %377 = vmatpush1.xpose.msra.mxu0 0.0
    %378 = vmatprep.subr.mxu0 0.0
    %379 = vmatpush1.xpose.msra.mxu0 0.0
    %380 = vmatprep.subr.mxu0 0.0
    %381 = vmatpush1.xpose.msra.mxu0 0.0
    %382 = vmatprep.subr.mxu0 0.0
    %383 = vmatpush1.xpose.msra.mxu0 0.0
    %384 = vmatprep.subr.mxu0 0.0
    %385 = vmatpush1.xpose.msra.mxu0 0.0
    %386 = vmatprep.subr.mxu0 0.0
    %387 = vmatpush1.xpose.msra.mxu0 0.0
    %388 = vmatprep.subr.mxu0 0.0
    %389 = vmatpush1.xpose.msra.mxu0 0.0
    %390 = vmatprep.subr.mxu0 0.0
    %391 = vmatpush1.xpose.msra.mxu0 0.0
    %392 = vmatprep.subr.mxu0 0.0
    %393 = vmatpush1.xpose.msra.mxu0 0.0
    %394 = vmatprep.subr.mxu0 0.0
    %395 = vmatpush1.xpose.msra.mxu0 0.0
    %396 = vmatprep.subr.mxu0 0.0
    %397 = vmatpush1.xpose.msra.mxu0 0.0
    %398 = vmatprep.mubr.f32.mxu0 0.0
    %399 = vmatmul.mubr.f32.gmra.mrb[0].mxu0 %v326
    %v400 = vpop.f32.mrb[0].mxu0
    %v401 = vadd.f32 0.0, %v400
    %v402 = vpop.f32.mrb[0].mxu0
    %403 = vmatprep.mubr.f32.mxu0 0.0
    %404 = vmatmul.mubr.f32.gmra.mrb[0].mxu0 %v327
    %v405 = vpop.f32.mrb[0].mxu0
    %v406 = vadd.f32 0.0, %v405
    %v407 = vpop.f32.mrb[0].mxu0
    %408 = vdwg.mxu0
    %v409 = vadd.f32 %v328, %v401
    %v410 = vadd.f32 %v329, %v406
    %411 = vst.msk [vmem:[#allocation2] sm:$0xff] %vm43, %v409
    %412 = vst.msk [vmem:[#allocation2 + $0x8] sm:$0xff] %vm43, %v410
    // Predicated region
    $region22: #{feedforward.1} parent=1 // pred_check
      %p413 = pneg %p18
    $region23: #{feedforward.1} parent=1 // pred_check_branch
      %415 = sbr.rel (%p413) target = $region25
    $region24: #{feedforward.1} parent=1 // pred_region
      %v416 = vld [vmem:[#allocation2] sm:$0xff]
      %v417 = vld [vmem:[#allocation2 + $0x8] sm:$0xff]
      %418 = vst.msk [vmem:[#allocation3] sm:$0xff] %vm43, %v416
      %419 = vst.msk [vmem:[#allocation3 + $0x8] sm:$0xff] %vm43, %v417
    $region25: #{feedforward.1} parent=1 // pred_fallthru
      _
    // Predicated region
    $region26: #{feedforward.1} parent=1 // pred_check
      _
    $region27: #{feedforward.1} parent=1 // pred_check_branch
      %421 = sbr.rel (0) target = $region29
    $region28: #{feedforward.1} parent=1 // pred_region
      %s423 = ssub.s32 256, 256
      %424 = vsyncadd [#allocation4], %s423
      %s425 = sshll.u32 [#allocation3], 4
      %s426 = int_to_ptr.vmem [resolvable:$true] %s425
      %431 = dma.vmem_to_hbm [thread:$0]  %s426, 256, %s4, [#allocation4], 128, 128, 8
    $region29: #{feedforward.1} parent=1 // pred_fallthru
      _
    // Predicated region
    $region30: #{feedforward.1} parent=1 // pred_check
      _
    $region31: #{feedforward.1} parent=1 // pred_check_branch
      %433 = sbr.rel (0) target = $region33
    $region32: #{feedforward.1} parent=1 // pred_region
      %434 = dma.done [#allocation4], 256
    $region33: #{feedforward.1} parent=1 // pred_fallthru
      _
    %435 = vsyncpa [#allocation4], 1

</llo_original>
